<compile_context>
chip_gen: v6e
topology: v6e:2x2x1
jax: 0.10.0
libtpu: 0.0.40
codegen_flags: <defaults>
</compile_context>

<pallas_src>
import math
import numpy as np
import jax
import jax.numpy as jnp
from jax.experimental import pallas as pl
from jax.experimental.pallas import tpu as pltpu

# ---------------- config ----------------
B = 2
T = 8                                # == block_size
C = 32                               # n_embd
N_HEAD = 4
N_QUERY_GROUPS = 4                   # == n_head -> MHA
HEAD_SIZE = C // N_HEAD              # 8
ROPE_N = HEAD_SIZE // 2              # rotary_percentage = 0.5 -> 4
QKV_OUT = (N_HEAD + 2 * N_QUERY_GROUPS) * HEAD_SIZE   # 96
INTERMEDIATE = 4 * C                 # 128
EPS = 1e-5
BT = B * T
SCALE = 1.0 / math.sqrt(HEAD_SIZE)

# consts slab row layout (all section starts are multiples of 8)
_LN_ROW = 0            # rows 0..3 : g1, b1, g2, b2
_COS_ROW = 8           # rows 8..39  : cos table for stacked [q;k]  (2*BT, C)
_SIN_ROW = 40          # rows 40..71 : sin table                    (2*BT, C)
_ROT_ROW = 72          # rows 72..103: rotate-half signed permutation (C, C)
_HM_ROW = 104          # rows 104..167: per-head column mask        (H*BT, C)
_BIAS_ROW = 168        # rows 168..231: additive score mask         (H*BT, BT) in cols 0..BT
_CONST_ROWS = 232


# ---------------- kernel ----------------
def block_kernel(x_ref, consts_ref, w1_ref, w2_ref, o_ref):
    x = x_ref[...]                                            # (BT, C)

    # ---- shared LayerNorm statistics (norm_1 / norm_2 differ only in affine) ----
    g1 = consts_ref[_LN_ROW + 0:_LN_ROW + 1, :]
    b1 = consts_ref[_LN_ROW + 1:_LN_ROW + 2, :]
    g2 = consts_ref[_LN_ROW + 2:_LN_ROW + 3, :]
    b2 = consts_ref[_LN_ROW + 3:_LN_ROW + 4, :]
    mu = jnp.mean(x, axis=-1, keepdims=True)
    xc = x - mu
    var = jnp.mean(xc * xc, axis=-1, keepdims=True)
    xhat = xc * jax.lax.rsqrt(var + EPS)
    n1 = xhat * g1 + b1
    n2 = xhat * g2 + b2

    # ---- fused projection: [n1; n2 | 1] @ [Wfc | s*Wq | Wk | Wv ; biases] ----
    ones2 = jnp.ones((2 * BT, 1), jnp.float32)
    lhs1 = jnp.concatenate([jnp.concatenate([n1, n2], axis=0), ones2], axis=-1)   # (2BT, C+1)
    proj1 = jnp.dot(lhs1, w1_ref[...], preferred_element_type=jnp.float32)        # (2BT, 224)
    fc = proj1[BT:2 * BT, 0:INTERMEDIATE]                                          # from n2 rows
    q = proj1[0:BT, INTERMEDIATE:INTERMEDIATE + C]                                 # pre-scaled q
    k = proj1[0:BT, INTERMEDIATE + C:INTERMEDIATE + 2 * C]
    v = proj1[0:BT, INTERMEDIATE + 2 * C:INTERMEDIATE + 3 * C]

    # ---- fused RoPE on stacked [q; k] (rotate-half == signed permutation matmul) ----
    cosf2 = consts_ref[_COS_ROW:_COS_ROW + 2 * BT, :]
    sinf2 = consts_ref[_SIN_ROW:_SIN_ROW + 2 * BT, :]
    rot = consts_ref[_ROT_ROW:_ROT_ROW + C, :]
    qk = jnp.concatenate([q, k], axis=0)                                           # (2BT, C)
    qk = qk * cosf2 + jnp.dot(qk, rot, preferred_element_type=jnp.float32) * sinf2
    q = qk[0:BT, :]
    k = qk[BT:2 * BT, :]

    # ---- head-batched causal attention (softmax scale already folded into Wq/bq) ----
    hm = consts_ref[_HM_ROW:_HM_ROW + N_HEAD * BT, :]                              # (H*BT, C)
    bias = consts_ref[_BIAS_ROW:_BIAS_ROW + N_HEAD * BT, 0:BT]                     # (H*BT, BT)
    qm = jnp.concatenate([q] * N_HEAD, axis=0) * hm                                # (H*BT, C)
    s = jax.lax.dot_general(qm, k, (((1,), (1,)), ((), ())),
                            preferred_element_type=jnp.float32) + bias             # (H*BT, BT)
    m = jnp.max(s, axis=-1, keepdims=True)
    e = jnp.exp(s - m)
    p = e / jnp.sum(e, axis=-1, keepdims=True)          # exact reciprocal (per review)
    ys = jnp.dot(p, v, preferred_element_type=jnp.float32) * hm                    # (H*BT, C)
    y = ys[0:BT] + ys[BT:2 * BT] + ys[2 * BT:3 * BT] + ys[3 * BT:4 * BT]           # (BT, C)

    # ---- fused output projections + biases: [gelu(fc) | y | 1] @ [Wmp; Wproj; bproj+bmp] ----
    act = jax.nn.gelu(fc, approximate=True)
    ones1 = jnp.ones((BT, 1), jnp.float32)
    lhs2 = jnp.concatenate([act, y, ones1], axis=-1)                               # (BT, 161)
    out = jnp.dot(lhs2, w2_ref[...], preferred_element_type=jnp.float32)           # (BT, C)

    # ---- parallel residual ----
    o_ref[...] = (out + x).astype(o_ref.dtype)


# ---------------- one-time operand packing (outside the jitted forward) ----------------
def prepare_operands(params, cos, sin):
    cos_np = np.asarray(cos, np.float32)                    # (T, ROPE_N)
    sin_np = np.asarray(sin, np.float32)

    # RoPE tables broadcast to the head-major (2*BT, C) layout of the stacked [q; k] slab;
    # non-rotary columns get cos=1 / sin=0 so they pass through unchanged.
    cos_h = np.concatenate([cos_np, np.ones((T, HEAD_SIZE - ROPE_N), np.float32)], -1)
    sin_h = np.concatenate([sin_np, np.zeros((T, HEAD_SIZE - ROPE_N), np.float32)], -1)
    cosf = np.tile(np.tile(cos_h, (1, N_HEAD)), (B, 1))     # (BT, C)
    sinf = np.tile(np.tile(sin_h, (1, N_HEAD)), (B, 1))
    cosf2 = np.tile(cosf, (2, 1))
    sinf2 = np.tile(sinf, (2, 1))

    # Signed permutation R with (x @ R) == rotate_half(x) on each head's rotary columns.
    rot = np.zeros((C, C), np.float32)
    half = ROPE_N // 2
    for h in range(N_HEAD):
        base = h * HEAD_SIZE
        for r in range(half):
            rot[base + half + r, base + r] = -1.0           # out col r      <- -in col half+r
            rot[base + r, base + half + r] = 1.0            # out col half+r <- +in col r

    # Per-head column mask for the head-stacked (H*BT, C) slabs.
    hmask = np.zeros((N_HEAD * BT, C), np.float32)
    for h in range(N_HEAD):
        hmask[h * BT:(h + 1) * BT, h * HEAD_SIZE:(h + 1) * HEAD_SIZE] = 1.0

    # Additive score bias: 0 where (same batch row block AND causal), else -1e30 (finite).
    r = np.arange(BT)
    same_batch = (r[:, None] // T) == (r[None, :] // T)
    causal = (r[:, None] % T) >= (r[None, :] % T)
    bias = np.where(same_batch & causal, 0.0, -1e30).astype(np.float32)
    bias = np.tile(bias, (N_HEAD, 1))                       # (H*BT, BT)

    consts = np.zeros((_CONST_ROWS, C), np.float32)
    consts[_LN_ROW + 0, :] = np.asarray(params["g1"]).reshape(-1)
    consts[_LN_ROW + 1, :] = np.asarray(params["b1"]).reshape(-1)
    consts[_LN_ROW + 2, :] = np.asarray(params["g2"]).reshape(-1)
    consts[_LN_ROW + 3, :] = np.asarray(params["b2"]).reshape(-1)
    consts[_COS_ROW:_COS_ROW + 2 * BT] = cosf2
    consts[_SIN_ROW:_SIN_ROW + 2 * BT] = sinf2
    consts[_ROT_ROW:_ROT_ROW + C] = rot
    consts[_HM_ROW:_HM_ROW + N_HEAD * BT] = hmask
    consts[_BIAS_ROW:_BIAS_ROW + N_HEAD * BT, 0:BT] = bias

    # W1: columns [Wfc(128) | scale*Wq(32) | Wk(32) | Wv(32)], bias row appended -> (33, 224).
    # qkv column layout per group g (q_per_kv=1): [q_g | k_g | v_g] * HEAD_SIZE.
    idx = np.arange(QKV_OUT).reshape(N_QUERY_GROUPS, 3, HEAD_SIZE)
    qcols = idx[:, 0, :].reshape(-1)
    kcols = idx[:, 1, :].reshape(-1)
    vcols = idx[:, 2, :].reshape(-1)
    wqkv = np.asarray(params["wqkv"], np.float32)
    bqkv = np.asarray(params["bqkv"], np.float32).reshape(-1)
    w1 = np.zeros((C + 1, INTERMEDIATE + 3 * C), np.float32)
    w1[:C, 0:INTERMEDIATE] = np.asarray(params["wfc"], np.float32)
    w1[C, 0:INTERMEDIATE] = np.asarray(params["bfc"], np.float32).reshape(-1)
    w1[:C, INTERMEDIATE:INTERMEDIATE + C] = wqkv[:, qcols] * SCALE
    w1[C, INTERMEDIATE:INTERMEDIATE + C] = bqkv[qcols] * SCALE
    w1[:C, INTERMEDIATE + C:INTERMEDIATE + 2 * C] = wqkv[:, kcols]
    w1[C, INTERMEDIATE + C:INTERMEDIATE + 2 * C] = bqkv[kcols]
    w1[:C, INTERMEDIATE + 2 * C:INTERMEDIATE + 3 * C] = wqkv[:, vcols]
    w1[C, INTERMEDIATE + 2 * C:INTERMEDIATE + 3 * C] = bqkv[vcols]

    # W2: rows [Wmp(128); Wproj(32); bproj + bmp] -> (161, 32).
    w2 = np.zeros((INTERMEDIATE + C + 1, C), np.float32)
    w2[0:INTERMEDIATE] = np.asarray(params["wmp"], np.float32)
    w2[INTERMEDIATE:INTERMEDIATE + C] = np.asarray(params["wproj"], np.float32)
    w2[INTERMEDIATE + C] = (np.asarray(params["bproj"], np.float32).reshape(-1)
                            + np.asarray(params["bmp"], np.float32).reshape(-1))

    return jnp.asarray(consts), jnp.asarray(w1), jnp.asarray(w2)


# ---------------- jitted forward (reshape + single pallas_call) ----------------
@jax.jit
def block_forward(x, consts, w1, w2):
    xf = x.reshape(BT, C)
    vmem = pl.BlockSpec(memory_space=pltpu.MemorySpace.VMEM)
    out = pl.pallas_call(
        block_kernel,
        out_shape=jax.ShapeDtypeStruct((BT, C), x.dtype),
        in_specs=[vmem, vmem, vmem, vmem],
        out_specs=vmem,
    )(xf, consts, w1, w2)
    return out.reshape(B, T, C)


# ---------------- pure-JAX reference (mirrors the torch code) ----------------
def block_ref(x, cos, sin, p):
    def ln(z, g, b):
        mu = z.mean(-1, keepdims=True)
        var = ((z - mu) ** 2).mean(-1, keepdims=True)
        return (z - mu) / jnp.sqrt(var + EPS) * g + b

    n1 = ln(x, p["g1"], p["b1"])
    qkv = n1 @ p["wqkv"] + p["bqkv"]                              # (B,T,96)
    qkv = qkv.reshape(B, T, N_QUERY_GROUPS, 3, HEAD_SIZE).transpose(0, 2, 3, 1, 4)
    q, k, v = qkv[:, :, 0], qkv[:, :, 1], qkv[:, :, 2]            # (B,H,T,hs)

    def rope_full(t):
        tr = t[..., :ROPE_N]
        half = ROPE_N // 2
        rot = jnp.concatenate([-tr[..., half:], tr[..., :half]], -1)
        return jnp.concatenate([tr * cos + rot * sin, t[..., ROPE_N:]], -1)

    q, k = rope_full(q), rope_full(k)
    att = jnp.einsum("bhqd,bhkd->bhqk", q, k) / math.sqrt(HEAD_SIZE)
    mask = jnp.tril(jnp.ones((T, T), bool))
    att = jnp.where(mask, att, -jnp.inf)
    att = jax.nn.softmax(att, -1)
    y = jnp.einsum("bhqk,bhkd->bhqd", att, v)
    y = y.transpose(0, 2, 1, 3).reshape(B, T, C)
    h = y @ p["wproj"] + p["bproj"]

    n2 = ln(x, p["g2"], p["b2"])
    mlp = jax.nn.gelu(n2 @ p["wfc"] + p["bfc"], approximate=True) @ p["wmp"] + p["bmp"]
    return mlp + h + x


# ---------------- deterministic setup ----------------
def make_params(key):
    ks = jax.random.split(key, 12)
    s = 0.02
    return {
        "g1": 1.0 + s * jax.random.normal(ks[0], (1, C), jnp.float32),
        "b1": s * jax.random.normal(ks[1], (1, C), jnp.float32),
        "wqkv": s * jax.random.normal(ks[2], (C, QKV_OUT), jnp.float32),
        "bqkv": s * jax.random.normal(ks[3], (1, QKV_OUT), jnp.float32),
        "wproj": s * jax.random.normal(ks[4], (C, C), jnp.float32),
        "bproj": s * jax.random.normal(ks[5], (1, C), jnp.float32),
        "g2": 1.0 + s * jax.random.normal(ks[6], (1, C), jnp.float32),
        "b2": s * jax.random.normal(ks[7], (1, C), jnp.float32),
        "wfc": s * jax.random.normal(ks[8], (C, INTERMEDIATE), jnp.float32),
        "bfc": s * jax.random.normal(ks[9], (1, INTERMEDIATE), jnp.float32),
        "wmp": s * jax.random.normal(ks[10], (INTERMEDIATE, C), jnp.float32),
        "bmp": s * jax.random.normal(ks[11], (1, C), jnp.float32),
    }


def make_rope():
    pos = jnp.arange(T, dtype=jnp.float32)
    theta = 1.0 / (10000.0 ** (jnp.arange(0, ROPE_N, 2, dtype=jnp.float32) / ROPE_N))
    idx = jnp.outer(pos, theta)                          # (T, ROPE_N//2)
    idx = jnp.concatenate([idx, idx], axis=-1)           # (T, ROPE_N)
    return jnp.cos(idx), jnp.sin(idx)


if __name__ == "__main__":
    key = jax.random.PRNGKey(0)
    kx, kp = jax.random.split(key)
    x = jax.random.normal(kx, (B, T, C), jnp.float32)
    cos, sin = make_rope()
    params = make_params(kp)

    # One-time packing of constants / fused weights (not part of the per-call forward path).
    consts, w1, w2 = prepare_operands(params, cos, sin)

    out = block_forward(x, consts, w1, w2)
    out = jax.block_until_ready(out)

    ref = jax.block_until_ready(block_ref(x, cos, sin, params))
    assert out.shape == (B, T, C)
    np.testing.assert_allclose(np.asarray(out), np.asarray(ref), rtol=2e-4, atol=2e-4)

    print("KERNEL_OK")
</pallas_src>

<mosaic_0001>
module attributes {stable_mosaic.version = 11 : i64} {
  func.func @block_kernel(%arg0: memref<16x32xf32, #tpu.memory_space<vmem>>, %arg1: memref<232x32xf32, #tpu.memory_space<vmem>>, %arg2: memref<33x224xf32, #tpu.memory_space<vmem>>, %arg3: memref<161x32xf32, #tpu.memory_space<vmem>>, %arg4: memref<16x32xf32, #tpu.memory_space<vmem>>) attributes {dimension_semantics = [], scalar_prefetch = 0 : i64, scratch_operands = 0 : i64, tpu.core_type = #tpu.core_type<tc>} {
    %c0 = arith.constant 0 : index
    %c0_0 = arith.constant 0 : index
    %0 = vector.load %arg0[%c0, %c0_0] : memref<16x32xf32, #tpu.memory_space<vmem>>, vector<16x32xf32>
    %c0_1 = arith.constant 0 : index
    %c0_2 = arith.constant 0 : index
    %1 = vector.load %arg1[%c0_1, %c0_2] : memref<232x32xf32, #tpu.memory_space<vmem>>, vector<1x32xf32>
    %c1 = arith.constant 1 : index
    %c0_3 = arith.constant 0 : index
    %2 = vector.load %arg1[%c1, %c0_3] : memref<232x32xf32, #tpu.memory_space<vmem>>, vector<1x32xf32>
    %c2 = arith.constant 2 : index
    %c0_4 = arith.constant 0 : index
    %3 = vector.load %arg1[%c2, %c0_4] : memref<232x32xf32, #tpu.memory_space<vmem>>, vector<1x32xf32>
    %c3 = arith.constant 3 : index
    %c0_5 = arith.constant 0 : index
    %4 = vector.load %arg1[%c3, %c0_5] : memref<232x32xf32, #tpu.memory_space<vmem>>, vector<1x32xf32>
    %cst = arith.constant dense<0.000000e+00> : vector<16xf32>
    %5 = vector.multi_reduction <add>, %0, %cst [1] : vector<16x32xf32> to vector<16xf32>
    %6 = vector.shape_cast %5 : vector<16xf32> to vector<16x1xf32>
    %cst_6 = arith.constant 3.200000e+01 : f32
    %7 = vector.broadcast %cst_6 : f32 to vector<16x1xf32>
    %8 = arith.divf %6, %7 : vector<16x1xf32>
    %9 = vector.broadcast %8 : vector<16x1xf32> to vector<16x32xf32>
    %10 = arith.subf %0, %9 : vector<16x32xf32>
    %11 = arith.mulf %10, %10 : vector<16x32xf32>
    %cst_7 = arith.constant dense<0.000000e+00> : vector<16xf32>
    %12 = vector.multi_reduction <add>, %11, %cst_7 [1] : vector<16x32xf32> to vector<16xf32>
    %13 = vector.shape_cast %12 : vector<16xf32> to vector<16x1xf32>
    %cst_8 = arith.constant 3.200000e+01 : f32
    %14 = vector.broadcast %cst_8 : f32 to vector<16x1xf32>
    %15 = arith.divf %13, %14 : vector<16x1xf32>
    %cst_9 = arith.constant 9.99999974E-6 : f32
    %16 = vector.broadcast %cst_9 : f32 to vector<16x1xf32>
    %17 = arith.addf %15, %16 : vector<16x1xf32>
    %18 = math.rsqrt %17 : vector<16x1xf32>
    %19 = vector.broadcast %18 : vector<16x1xf32> to vector<16x32xf32>
    %20 = arith.mulf %10, %19 : vector<16x32xf32>
    %21 = vector.broadcast %1 : vector<1x32xf32> to vector<16x32xf32>
    %22 = arith.mulf %20, %21 : vector<16x32xf32>
    %23 = vector.broadcast %2 : vector<1x32xf32> to vector<16x32xf32>
    %24 = arith.addf %22, %23 : vector<16x32xf32>
    %25 = vector.broadcast %3 : vector<1x32xf32> to vector<16x32xf32>
    %26 = arith.mulf %20, %25 : vector<16x32xf32>
    %27 = vector.broadcast %4 : vector<1x32xf32> to vector<16x32xf32>
    %28 = arith.addf %26, %27 : vector<16x32xf32>
    %cst_10 = arith.constant 1.000000e+00 : f32
    %29 = vector.broadcast %cst_10 : f32 to vector<32x1xf32>
    %30 = tpu.concatenate %24, %28 in 0 : vector<16x32xf32>, vector<16x32xf32> -> vector<32x32xf32>
    %31 = tpu.concatenate %30, %29 in 1 : vector<32x32xf32>, vector<32x1xf32> -> vector<32x33xf32>
    %c0_11 = arith.constant 0 : index
    %c0_12 = arith.constant 0 : index
    %32 = vector.load %arg2[%c0_11, %c0_12] : memref<33x224xf32, #tpu.memory_space<vmem>>, vector<33x224xf32>
    %cst_13 = arith.constant dense<0.000000e+00> : vector<32x224xf32>
    %33 = tpu.matmul %31, %32, %cst_13 {dimension_numbers = #tpu.dot_dimension_numbers<[1], [0], [0], [1], [0, 0, 1, 1], [], []>} : vector<32x33xf32>, vector<33x224xf32>, vector<32x224xf32> -> vector<32x224xf32>
    %34 = vector.extract_strided_slice %33 {offsets = [16, 0], sizes = [16, 128], strides = [1, 1]} : vector<32x224xf32> to vector<16x128xf32>
    %35 = vector.extract_strided_slice %33 {offsets = [0, 128], sizes = [16, 32], strides = [1, 1]} : vector<32x224xf32> to vector<16x32xf32>
    %36 = vector.extract_strided_slice %33 {offsets = [0, 160], sizes = [16, 32], strides = [1, 1]} : vector<32x224xf32> to vector<16x32xf32>
    %37 = vector.extract_strided_slice %33 {offsets = [0, 192], sizes = [16, 32], strides = [1, 1]} : vector<32x224xf32> to vector<16x32xf32>
    %c8 = arith.constant 8 : index
    %c0_14 = arith.constant 0 : index
    %38 = vector.load %arg1[%c8, %c0_14] : memref<232x32xf32, #tpu.memory_space<vmem>>, vector<32x32xf32>
    %c40 = arith.constant 40 : index
    %c0_15 = arith.constant 0 : index
    %39 = vector.load %arg1[%c40, %c0_15] : memref<232x32xf32, #tpu.memory_space<vmem>>, vector<32x32xf32>
    %c72 = arith.constant 72 : index
    %c0_16 = arith.constant 0 : index
    %40 = vector.load %arg1[%c72, %c0_16] : memref<232x32xf32, #tpu.memory_space<vmem>>, vector<32x32xf32>
    %41 = tpu.concatenate %35, %36 in 0 : vector<16x32xf32>, vector<16x32xf32> -> vector<32x32xf32>
    %42 = arith.mulf %41, %38 : vector<32x32xf32>
    %cst_17 = arith.constant dense<0.000000e+00> : vector<32x32xf32>
    %43 = tpu.matmul %41, %40, %cst_17 {dimension_numbers = #tpu.dot_dimension_numbers<[1], [0], [0], [1], [0, 0, 1, 1], [], []>} : vector<32x32xf32>, vector<32x32xf32>, vector<32x32xf32> -> vector<32x32xf32>
    %44 = arith.mulf %43, %39 : vector<32x32xf32>
    %45 = arith.addf %42, %44 : vector<32x32xf32>
    %46 = vector.extract_strided_slice %45 {offsets = [0, 0], sizes = [16, 32], strides = [1, 1]} : vector<32x32xf32> to vector<16x32xf32>
    %47 = vector.extract_strided_slice %45 {offsets = [16, 0], sizes = [16, 32], strides = [1, 1]} : vector<32x32xf32> to vector<16x32xf32>
    %c104 = arith.constant 104 : index
    %c0_18 = arith.constant 0 : index
    %48 = vector.load %arg1[%c104, %c0_18] : memref<232x32xf32, #tpu.memory_space<vmem>>, vector<64x32xf32>
    %c168 = arith.constant 168 : index
    %c0_19 = arith.constant 0 : index
    %49 = vector.load %arg1[%c168, %c0_19] : memref<232x32xf32, #tpu.memory_space<vmem>>, vector<64x16xf32>
    %50 = tpu.concatenate %46, %46, %46, %46 in 0 : vector<16x32xf32>, vector<16x32xf32>, vector<16x32xf32>, vector<16x32xf32> -> vector<64x32xf32>
    %51 = arith.mulf %50, %48 : vector<64x32xf32>
    %cst_20 = arith.constant dense<0.000000e+00> : vector<64x16xf32>
    %52 = tpu.matmul %51, %47, %cst_20 {dimension_numbers = #tpu.dot_dimension_numbers<[1], [1], [0], [0], [0, 0, 1, 0], [], []>} : vector<64x32xf32>, vector<16x32xf32>, vector<64x16xf32> -> vector<64x16xf32>
    %53 = arith.addf %52, %49 : vector<64x16xf32>
    %cst_21 = arith.constant dense<0xFF800000> : vector<64xf32>
    %54 = vector.multi_reduction <maximumf>, %53, %cst_21 [1] : vector<64x16xf32> to vector<64xf32>
    %55 = vector.shape_cast %54 : vector<64xf32> to vector<64x1xf32>
    %56 = vector.broadcast %55 : vector<64x1xf32> to vector<64x16xf32>
    %57 = arith.subf %53, %56 : vector<64x16xf32>
    %58 = math.exp %57 : vector<64x16xf32>
    %cst_22 = arith.constant dense<0.000000e+00> : vector<64xf32>
    %59 = vector.multi_reduction <add>, %58, %cst_22 [1] : vector<64x16xf32> to vector<64xf32>
    %60 = vector.shape_cast %59 : vector<64xf32> to vector<64x1xf32>
    %61 = vector.broadcast %60 : vector<64x1xf32> to vector<64x16xf32>
    %62 = arith.divf %58, %61 : vector<64x16xf32>
    %cst_23 = arith.constant dense<0.000000e+00> : vector<64x32xf32>
    %63 = tpu.matmul %62, %37, %cst_23 {dimension_numbers = #tpu.dot_dimension_numbers<[1], [0], [0], [1], [0, 0, 1, 1], [], []>} : vector<64x16xf32>, vector<16x32xf32>, vector<64x32xf32> -> vector<64x32xf32>
    %64 = arith.mulf %63, %48 : vector<64x32xf32>
    %65 = vector.extract_strided_slice %64 {offsets = [0, 0], sizes = [16, 32], strides = [1, 1]} : vector<64x32xf32> to vector<16x32xf32>
    %66 = vector.extract_strided_slice %64 {offsets = [16, 0], sizes = [16, 32], strides = [1, 1]} : vector<64x32xf32> to vector<16x32xf32>
    %67 = arith.addf %65, %66 : vector<16x32xf32>
    %68 = vector.extract_strided_slice %64 {offsets = [32, 0], sizes = [16, 32], strides = [1, 1]} : vector<64x32xf32> to vector<16x32xf32>
    %69 = arith.addf %67, %68 : vector<16x32xf32>
    %70 = vector.extract_strided_slice %64 {offsets = [48, 0], sizes = [16, 32], strides = [1, 1]} : vector<64x32xf32> to vector<16x32xf32>
    %71 = arith.addf %69, %70 : vector<16x32xf32>
    %72 = arith.mulf %34, %34 : vector<16x128xf32>
    %73 = arith.mulf %34, %72 : vector<16x128xf32>
    %cst_24 = arith.constant 4.471500e-02 : f32
    %74 = vector.broadcast %cst_24 : f32 to vector<16x128xf32>
    %75 = arith.mulf %74, %73 : vector<16x128xf32>
    %76 = arith.addf %34, %75 : vector<16x128xf32>
    %cst_25 = arith.constant 0.797884583 : f32
    %77 = vector.broadcast %cst_25 : f32 to vector<16x128xf32>
    %78 = arith.mulf %77, %76 : vector<16x128xf32>
    %79 = math.tanh %78 : vector<16x128xf32>
    %cst_26 = arith.constant 1.000000e+00 : f32
    %80 = vector.broadcast %cst_26 : f32 to vector<16x128xf32>
    %81 = arith.addf %80, %79 : vector<16x128xf32>
    %cst_27 = arith.constant 5.000000e-01 : f32
    %82 = vector.broadcast %cst_27 : f32 to vector<16x128xf32>
    %83 = arith.mulf %82, %81 : vector<16x128xf32>
    %84 = arith.mulf %34, %83 : vector<16x128xf32>
    %cst_28 = arith.constant 1.000000e+00 : f32
    %85 = vector.broadcast %cst_28 : f32 to vector<16x1xf32>
    %86 = tpu.concatenate %84, %71, %85 in 1 : vector<16x128xf32>, vector<16x32xf32>, vector<16x1xf32> -> vector<16x161xf32>
    %c0_29 = arith.constant 0 : index
    %c0_30 = arith.constant 0 : index
    %87 = vector.load %arg3[%c0_29, %c0_30] : memref<161x32xf32, #tpu.memory_space<vmem>>, vector<161x32xf32>
    %cst_31 = arith.constant dense<0.000000e+00> : vector<16x32xf32>
    %88 = tpu.matmul %86, %87, %cst_31 {dimension_numbers = #tpu.dot_dimension_numbers<[1], [0], [0], [1], [0, 0, 1, 1], [], []>} : vector<16x161xf32>, vector<161x32xf32>, vector<16x32xf32> -> vector<16x32xf32>
    %89 = arith.addf %88, %0 : vector<16x32xf32>
    %c0_32 = arith.constant 0 : index
    %c0_33 = arith.constant 0 : index
    %90 = vector.load %arg4[%c0_32, %c0_33] : memref<16x32xf32, #tpu.memory_space<vmem>>, vector<16x32xf32>
    tpu.vector_store %arg4[%c0_32, %c0_33], %89 {strides = array<i32>} : memref<16x32xf32, #tpu.memory_space<vmem>>, vector<16x32xf32>,
    return
  }
}

</mosaic_0001>

<llo_original>
// kernel: block_forward.1
$region0: #{block_forward.1}
  #allocation0 [shape = 'u32[]', space=smem, size = 0x4, offset = 0x4, fixed_abs, tag = 'smem constant byte address 0x4 - core index']
  #allocation1 [shape = 'u32[144,128]{1,0:T(1,128)}', space=vmem, size = 0x12000, scoped, tag = 'internal scratch']
  %s0 = inlined_call_operand.vmem [shape: f32[16,32], index: 0, kind: input, shape index: {}]
  %s1 = inlined_call_operand.vmem [shape: f32[232,32], index: 1, kind: input, shape index: {}]
  %s2 = inlined_call_operand.vmem [shape: f32[33,224], index: 2, kind: input, shape index: {}]
  %s3 = inlined_call_operand.vmem [shape: f32[161,32], index: 3, kind: input, shape index: {}]
  %s4 = inlined_call_operand.hbm [shape: f32[16,32], index: 4, kind: output, shape index: {}]
  %s5 = sld [smem:[#allocation0]]
  $region26: #{block_forward.1} parent=0
    _
  %s7 = ssub.s32 1, %s5
  %s8 = scalar_select 0, %s7, %s5
  $region1: #{block_forward.1} parent=0
    #allocation2 [shape = 'u8[8192]{0}', space=vmem, size = 0x2000, scoped, tag = 'output window, operand 0, single buffered']
    #allocation3 [shape = 's32[1]{0}', space=sflag, size = 0x4, scoped, tag = 'scoped memory for block_forward.1']
    %9 = vsyncpa [#allocation3], 0
    // Predicated region
    $region2: #{block_forward.1} parent=1 // pred_check
      _
    $region3: #{block_forward.1} parent=1 // pred_check_branch
      %11 = sbr.rel (0) target = $region5
    $region4: #{block_forward.1} parent=1 // pred_region
      _
    $region5: #{block_forward.1} parent=1 // pred_fallthru
      _
    // Predicated region
    $region6: #{block_forward.1} parent=1 // pred_check
      _
    $region7: #{block_forward.1} parent=1 // pred_check_branch
      %13 = sbr.rel (0) target = $region9
    $region8: #{block_forward.1} parent=1 // pred_region
      _
    $region9: #{block_forward.1} parent=1 // pred_fallthru
      _
    // Predicated region
    $region10: #{block_forward.1} parent=1 // pred_check
      _
    $region11: #{block_forward.1} parent=1 // pred_check_branch
      %15 = sbr.rel (0) target = $region13
    $region12: #{block_forward.1} parent=1 // pred_region
      _
    $region13: #{block_forward.1} parent=1 // pred_fallthru
      _
    // Predicated region
    $region14: #{block_forward.1} parent=1 // pred_check
      _
    $region15: #{block_forward.1} parent=1 // pred_check_branch
      %17 = sbr.rel (0) target = $region17
    $region16: #{block_forward.1} parent=1 // pred_region
      _
    $region17: #{block_forward.1} parent=1 // pred_fallthru
      _
    %v18 = vld [vmem:[%s0] sm:$0xff]
    %v19 = vld [vmem:[%s0 + $0x8] sm:$0xff]
    %v20 = vld [vmem:[%s1] sm:$0x1]
    %v21 = vld [vmem:[%s1 + $0x1] sm:$0x1]
    %v22 = vld [vmem:[%s1 + $0x2] sm:$0x1]
    %v23 = vld [vmem:[%s1 + $0x3] sm:$0x1]
    %vm24 = vcmask 261120
    %v25 = vsel %vm24, %v18, 0.0
    %26 = vadd.xlane.f32.xlu0 %v25
    %v27 = vpop.xlane.xlu0 %26
    %v28 = vsel %vm24, %v19, 0.0
    %29 = vadd.xlane.f32.xlu0 %v28
    %v30 = vpop.xlane.xlu0 %29
    %v31 = vrcp.pop 32.0
    %v32 = vmul.f32 %v27, %v31
    %v33 = vmul.f32 %v30, %v31
    %v34 = vsub.f32 %v18, %v32
    %v35 = vsub.f32 %v19, %v33
    %v36 = vmul.f32 %v34, %v34
    %v37 = vmul.f32 %v35, %v35
    %v38 = vsel %vm24, %v36, 0.0
    %39 = vadd.xlane.f32.xlu0 %v38
    %v40 = vpop.xlane.xlu0 %39
    %v41 = vsel %vm24, %v37, 0.0
    %42 = vadd.xlane.f32.xlu0 %v41
    %v43 = vpop.xlane.xlu0 %42
    %v44 = vmul.f32 %v40, %v31
    %v45 = vmul.f32 %v43, %v31
    %v46 = vadd.f32 %v44, 1e-05
    %v47 = vadd.f32 %v45, 1e-05
    %v48 = vrsqrt.pop %v46
    %v49 = vrsqrt.pop %v47
    %v50 = vmul.f32 %v34, %v48
    %v51 = vmul.f32 %v35, %v49
    %v52 = vlaneseq
    %v53 = vshrl.u32 %v52, 7
    %v54 = vsub.s32 0, %v53
    %v55 = vrot.slane %v20, %v54
    %v56 = vmul.f32 %v50, %v55
    %v57 = vmul.f32 %v51, %v55
    %v58 = vlaneseq
    %v59 = vshrl.u32 %v58, 7
    %v60 = vsub.s32 0, %v59
    %v61 = vrot.slane %v21, %v60
    %v62 = vadd.f32 %v56, %v61
    %v63 = vadd.f32 %v57, %v61
    %v64 = vlaneseq
    %v65 = vshrl.u32 %v64, 7
    %v66 = vsub.s32 0, %v65
    %v67 = vrot.slane %v22, %v66
    %v68 = vmul.f32 %v50, %v67
    %v69 = vmul.f32 %v51, %v67
    %v70 = vlaneseq
    %v71 = vshrl.u32 %v70, 7
    %v72 = vsub.s32 0, %v71
    %v73 = vrot.slane %v23, %v72
    %v74 = vadd.f32 %v68, %v73
    %v75 = vadd.f32 %v69, %v73
    %v76 = vsel %vm24, %v62, 1.0
    %v77 = vsel %vm24, %v63, 1.0
    %v78 = vsel %vm24, %v74, 1.0
    %v79 = vsel %vm24, %v75, 1.0
    %v80 = vld [vmem:[%s2] sm:$0xff]
    %v81 = vld [vmem:[%s2 + $0x8] sm:$0xff]
    %v82 = vld [vmem:[%s2 + $0x10] sm:$0xff]
    %v83 = vld [vmem:[%s2 + $0x18] sm:$0xff]
    %v84 = vld [vmem:[%s2 + $0x20] sm:$0xff]
    %v85 = vld [vmem:[%s2 + $0x28] sm:$0xff]
    %v86 = vld [vmem:[%s2 + $0x30] sm:$0xff]
    %v87 = vld [vmem:[%s2 + $0x38] sm:$0xff]
    %v88 = vld [vmem:[%s2 + $0x40] sm:$0x1]
    %v89 = vld [vmem:[%s2 + $0x48] sm:$0x1]
    %vm90 = vcmask 269312
    %v92 = vsel %vm90, %v76, 0
    %v95 = vsel %vm90, %v77, 0
    %v98 = vsel %vm90, %v78, 0
    %v101 = vsel %vm90, %v79, 0
    %vm103 = vcmask 1040384
    %v105 = vsel %vm103, %v88, 0
    %v108 = vsel %vm103, %v89, 0
    %110 = vmatprep.subr.mxu0 0.0
    %111 = vmatpush1.msra.mxu0 0.0
    %112 = vmatprep.subr.mxu0 0.0
    %113 = vmatpush1.msra.mxu0 0.0
    %114 = vmatprep.subr.mxu0 0.0
    %115 = vmatpush1.msra.mxu0 0.0
    %116 = vmatprep.subr.mxu0 0.0
    %117 = vmatpush1.msra.mxu0 0.0
    %118 = vmatprep.subr.mxu0 0.0
    %119 = vmatpush1.msra.mxu0 0.0
    %120 = vmatprep.subr.mxu0 0.0
    %121 = vmatpush1.msra.mxu0 0.0
    %122 = vmatprep.subr.mxu0 0.0
    %123 = vmatpush1.msra.mxu0 0.0
    %124 = vmatprep.subr.mxu0 0.0
    %125 = vmatpush1.msra.mxu0 0.0
    %126 = vmatprep.subr.mxu0 0.0
    %127 = vmatpush1.msra.mxu0 0.0
    %128 = vmatprep.subr.mxu0 0.0
    %129 = vmatpush1.msra.mxu0 0.0
    %130 = vmatprep.subr.mxu0 0.0
    %131 = vmatpush1.msra.mxu0 0.0
    %132 = vmatprep.subr.mxu0 %v108
    %133 = vmatpush1.msra.mxu0 %v105
    %134 = vmatprep.subr.mxu0 %v87
    %135 = vmatpush1.msra.mxu0 %v86
    %136 = vmatprep.subr.mxu0 %v85
    %137 = vmatpush1.msra.mxu0 %v84
    %138 = vmatprep.subr.mxu0 %v83
    %139 = vmatpush1.msra.mxu0 %v82
    %140 = vmatprep.subr.mxu0 %v81
    %141 = vmatpush1.msra.mxu0 %v80
    %142 = vmatprep.subr.mxu0 0.0
    %143 = vmatpush2.msra.mxu0 0.0
    %144 = vmatprep.subr.mxu0 0.0
    %145 = vmatpush2.msra.mxu0 0.0
    %146 = vmatprep.subr.mxu0 0.0
    %147 = vmatpush2.msra.mxu0 0.0
    %148 = vmatprep.subr.mxu0 0.0
    %149 = vmatpush2.msra.mxu0 0.0
    %150 = vmatprep.subr.mxu0 0.0
    %151 = vmatpush2.msra.mxu0 0.0
    %152 = vmatprep.subr.mxu0 0.0
    %153 = vmatpush2.msra.mxu0 0.0
    %154 = vmatprep.subr.mxu0 0.0
    %155 = vmatpush2.msra.mxu0 0.0
    %156 = vmatprep.subr.mxu0 0.0
    %157 = vmatpush2.msra.mxu0 0.0
    %158 = vmatprep.subr.mxu0 0.0
    %159 = vmatpush2.msra.mxu0 0.0
    %160 = vmatprep.subr.mxu0 0.0
    %161 = vmatpush2.msra.mxu0 0.0
    %162 = vmatprep.subr.mxu0 0.0
    %163 = vmatpush2.msra.mxu0 0.0
    %164 = vmatprep.subr.mxu0 0.0
    %165 = vmatpush2.msra.mxu0 0.0
    %166 = vmatprep.subr.mxu0 0.0
    %167 = vmatpush2.msra.mxu0 0.0
    %168 = vmatprep.subr.mxu0 0.0
    %169 = vmatpush2.msra.mxu0 0.0
    %170 = vmatprep.subr.mxu0 0.0
    %171 = vmatpush2.msra.mxu0 0.0
    %172 = vmatprep.subr.mxu0 0.0
    %173 = vmatpush2.msra.mxu0 0.0
    %174 = vmatprep.mubr.f32.mxu0 0.0
    %175 = vmatmul.mubr.f32.gmra.mxu0 %v92
    %v176 = vpop.f32.mrf.mxu0
    %v177 = vpop.f32.mrf.mxu0
    %v178 = vadd.f32 0.0, %v177
    %179 = vmatprep.mubr.f32.mxu0 0.0
    %180 = vmatmul.mubr.f32.gmra.mxu0 %v95
    %v181 = vpop.f32.mrf.mxu0
    %v182 = vpop.f32.mrf.mxu0
    %v183 = vadd.f32 0.0, %v182
    %184 = vmatprep.mubr.f32.mxu0 0.0
    %185 = vmatmul.mubr.f32.gmra.mxu0 %v98
    %v186 = vpop.f32.mrf.mxu0
    %v187 = vadd.f32 0.0, %v186
    %v188 = vpop.f32.mrf.mxu0
    %189 = vmatprep.mubr.f32.mxu0 0.0
    %190 = vmatmul.mubr.f32.gmra.mxu0 %v101
    %v191 = vpop.f32.mrf.mxu0
    %v192 = vadd.f32 0.0, %v191
    %v193 = vpop.f32.mrf.mxu0
    %194 = vdwg.mxu0
    %v195 = vld [vmem:[%s1 + $0x8] sm:$0xff]
    %v196 = vld [vmem:[%s1 + $0x10] sm:$0xff]
    %v197 = vld [vmem:[%s1 + $0x18] sm:$0xff]
    %v198 = vld [vmem:[%s1 + $0x20] sm:$0xff]
    %v199 = vld [vmem:[%s1 + $0x28] sm:$0xff]
    %v200 = vld [vmem:[%s1 + $0x30] sm:$0xff]
    %v201 = vld [vmem:[%s1 + $0x38] sm:$0xff]
    %v202 = vld [vmem:[%s1 + $0x40] sm:$0xff]
    %v203 = vld [vmem:[%s1 + $0x48] sm:$0xff]
    %v204 = vld [vmem:[%s1 + $0x50] sm:$0xff]
    %v205 = vld [vmem:[%s1 + $0x58] sm:$0xff]
    %v206 = vld [vmem:[%s1 + $0x60] sm:$0xff]
    %209 = vrot.lane.b32.xlu0 %v178, 96
    %v210 = vpop.permute.xlu0 %209
    %211 = vrot.lane.b32.xlu0 %v183, 96
    %v212 = vpop.permute.xlu0 %211
    %v215 = vmul.f32 %v178, %v195
    %v216 = vmul.f32 %v183, %v196
    %v217 = vmul.f32 %v210, %v197
    %v218 = vmul.f32 %v212, %v198
    %v219 = vsel %vm24, %v178, 0
    %v221 = vsel %vm24, %v183, 0
    %v223 = vsel %vm24, %v210, 0
    %v225 = vsel %vm24, %v212, 0
    %227 = vmatprep.subr.mxu0 0.0
    %228 = vmatpush1.msra.mxu0 0.0
    %229 = vmatprep.subr.mxu0 0.0
    %230 = vmatpush1.msra.mxu0 0.0
    %231 = vmatprep.subr.mxu0 0.0
    %232 = vmatpush1.msra.mxu0 0.0
    %233 = vmatprep.subr.mxu0 0.0
    %234 = vmatpush1.msra.mxu0 0.0
    %235 = vmatprep.subr.mxu0 0.0
    %236 = vmatpush1.msra.mxu0 0.0
    %237 = vmatprep.subr.mxu0 0.0
    %238 = vmatpush1.msra.mxu0 0.0
    %239 = vmatprep.subr.mxu0 0.0
    %240 = vmatpush1.msra.mxu0 0.0
    %241 = vmatprep.subr.mxu0 0.0
    %242 = vmatpush1.msra.mxu0 0.0
    %243 = vmatprep.subr.mxu0 0.0
    %244 = vmatpush1.msra.mxu0 0.0
    %245 = vmatprep.subr.mxu0 0.0
    %246 = vmatpush1.msra.mxu0 0.0
    %247 = vmatprep.subr.mxu0 0.0
    %248 = vmatpush1.msra.mxu0 0.0
    %249 = vmatprep.subr.mxu0 0.0
    %250 = vmatpush1.msra.mxu0 0.0
    %251 = vmatprep.subr.mxu0 0.0
    %252 = vmatpush1.msra.mxu0 %v206
    %253 = vmatprep.subr.mxu0 0.0
    %254 = vmatpush1.msra.mxu0 %v205
    %255 = vmatprep.subr.mxu0 0.0
    %256 = vmatpush1.msra.mxu0 %v204
    %257 = vmatprep.subr.mxu0 0.0
    %258 = vmatpush1.msra.mxu0 %v203
    %259 = vmatprep.subr.mxu0 0.0
    %260 = vmatpush2.msra.mxu0 0.0
    %261 = vmatprep.subr.mxu0 0.0
    %262 = vmatpush2.msra.mxu0 0.0
    %263 = vmatprep.subr.mxu0 0.0
    %264 = vmatpush2.msra.mxu0 0.0
    %265 = vmatprep.subr.mxu0 0.0
    %266 = vmatpush2.msra.mxu0 0.0
    %267 = vmatprep.subr.mxu0 0.0
    %268 = vmatpush2.msra.mxu0 0.0
    %269 = vmatprep.subr.mxu0 0.0
    %270 = vmatpush2.msra.mxu0 0.0
    %271 = vmatprep.subr.mxu0 0.0
    %272 = vmatpush2.msra.mxu0 0.0
    %273 = vmatprep.subr.mxu0 0.0
    %274 = vmatpush2.msra.mxu0 0.0
    %275 = vmatprep.subr.mxu0 0.0
    %276 = vmatpush2.msra.mxu0 0.0
    %277 = vmatprep.subr.mxu0 0.0
    %278 = vmatpush2.msra.mxu0 0.0
    %279 = vmatprep.subr.mxu0 0.0
    %280 = vmatpush2.msra.mxu0 0.0
    %281 = vmatprep.subr.mxu0 0.0
    %282 = vmatpush2.msra.mxu0 0.0
    %283 = vmatprep.subr.mxu0 0.0
    %284 = vmatpush2.msra.mxu0 0.0
    %285 = vmatprep.subr.mxu0 0.0
    %286 = vmatpush2.msra.mxu0 0.0
    %287 = vmatprep.subr.mxu0 0.0
    %288 = vmatpush2.msra.mxu0 0.0
    %289 = vmatprep.subr.mxu0 0.0
    %290 = vmatpush2.msra.mxu0 0.0
    %291 = vmatprep.mubr.f32.mxu0 0.0
    %292 = vmatmul.mubr.f32.gmra.mxu0 %v219
    %v293 = vpop.f32.mrf.mxu0
    %v294 = vadd.f32 0.0, %v293
    %v295 = vpop.f32.mrf.mxu0
    %296 = vmatprep.mubr.f32.mxu0 0.0
    %297 = vmatmul.mubr.f32.gmra.mxu0 %v221
    %v298 = vpop.f32.mrf.mxu0
    %v299 = vadd.f32 0.0, %v298
    %v300 = vpop.f32.mrf.mxu0
    %301 = vmatprep.mubr.f32.mxu0 0.0
    %302 = vmatmul.mubr.f32.gmra.mxu0 %v223
    %v303 = vpop.f32.mrf.mxu0
    %v304 = vadd.f32 0.0, %v303
    %v305 = vpop.f32.mrf.mxu0
    %306 = vmatprep.mubr.f32.mxu0 0.0
    %307 = vmatmul.mubr.f32.gmra.mxu0 %v225
    %v308 = vpop.f32.mrf.mxu0
    %v309 = vadd.f32 0.0, %v308
    %v310 = vpop.f32.mrf.mxu0
    %311 = vdwg.mxu0
    %v312 = vmul.f32 %v294, %v199
    %v313 = vmul.f32 %v299, %v200
    %v314 = vmul.f32 %v304, %v201
    %v315 = vmul.f32 %v309, %v202
    %v316 = vadd.f32 %v215, %v312
    %v317 = vadd.f32 %v216, %v313
    %v318 = vadd.f32 %v217, %v314
    %v319 = vadd.f32 %v218, %v315
    %v320 = vld [vmem:[%s1 + $0x68] sm:$0xff]
    %v321 = vld [vmem:[%s1 + $0x70] sm:$0xff]
    %v322 = vld [vmem:[%s1 + $0x78] sm:$0xff]
    %v323 = vld [vmem:[%s1 + $0x80] sm:$0xff]
    %v324 = vld [vmem:[%s1 + $0x88] sm:$0xff]
    %v325 = vld [vmem:[%s1 + $0x90] sm:$0xff]
    %v326 = vld [vmem:[%s1 + $0x98] sm:$0xff]
    %v327 = vld [vmem:[%s1 + $0xa0] sm:$0xff]
    %v328 = vld [vmem:[%s1 + $0xa8] sm:$0xff]
    %v329 = vld [vmem:[%s1 + $0xb0] sm:$0xff]
    %v330 = vld [vmem:[%s1 + $0xb8] sm:$0xff]
    %v331 = vld [vmem:[%s1 + $0xc0] sm:$0xff]
    %v332 = vld [vmem:[%s1 + $0xc8] sm:$0xff]
    %v333 = vld [vmem:[%s1 + $0xd0] sm:$0xff]
    %v334 = vld [vmem:[%s1 + $0xd8] sm:$0xff]
    %v335 = vld [vmem:[%s1 + $0xe0] sm:$0xff]
    %v336 = vmul.f32 %v316, %v320
    %v337 = vmul.f32 %v317, %v321
    %v338 = vmul.f32 %v316, %v322
    %v339 = vmul.f32 %v317, %v323
    %v340 = vmul.f32 %v316, %v324
    %v341 = vmul.f32 %v317, %v325
    %v342 = vmul.f32 %v316, %v326
    %v343 = vmul.f32 %v317, %v327
    %v345 = vsel %vm24, %v336, 0
    %v348 = vsel %vm24, %v337, 0
    %v351 = vsel %vm24, %v338, 0
    %v354 = vsel %vm24, %v339, 0
    %v357 = vsel %vm24, %v340, 0
    %v360 = vsel %vm24, %v341, 0
    %v363 = vsel %vm24, %v342, 0
    %v366 = vsel %vm24, %v343, 0
    %v369 = vsel %vm24, %v318, 0
    %v372 = vsel %vm24, %v319, 0
    %374 = vmatprep.subr.mxu0 0.0
    %375 = vmatpush1.xpose.msra.mxu0 0.0
    %376 = vmatprep.subr.mxu0 0.0
    %377 = vmatpush1.xpose.msra.mxu0 0.0
    %378 = vmatprep.subr.mxu0 0.0
    %379 = vmatpush1.xpose.msra.mxu0 0.0
    %380 = vmatprep.subr.mxu0 0.0
    %381 = vmatpush1.xpose.msra.mxu0 0.0
    %382 = vmatprep.subr.mxu0 0.0
    %383 = vmatpush1.xpose.msra.mxu0 0.0
    %384 = vmatprep.subr.mxu0 0.0
    %385 = vmatpush1.xpose.msra.mxu0 0.0
    %386 = vmatprep.subr.mxu0 0.0
    %387 = vmatpush1.xpose.msra.mxu0 0.0
    %388 = vmatprep.subr.mxu0 0.0
    %389 = vmatpush1.xpose.msra.mxu0 0.0
    %390 = vmatprep.subr.mxu0 0.0
    %391 = vmatpush1.xpose.msra.mxu0 0.0
    %392 = vmatprep.subr.mxu0 0.0
    %393 = vmatpush1.xpose.msra.mxu0 0.0
    %394 = vmatprep.subr.mxu0 0.0
    %395 = vmatpush1.xpose.msra.mxu0 0.0
    %396 = vmatprep.subr.mxu0 0.0
    %397 = vmatpush1.xpose.msra.mxu0 0.0
    %398 = vmatprep.subr.mxu0 0.0
    %399 = vmatpush1.xpose.msra.mxu0 0.0
    %400 = vmatprep.subr.mxu0 0.0
    %401 = vmatpush1.xpose.msra.mxu0 0.0
    %402 = vmatprep.subr.mxu0 0.0
    %403 = vmatpush1.xpose.msra.mxu0 %v372
    %404 = vmatprep.subr.mxu0 0.0
    %405 = vmatpush1.xpose.msra.mxu0 %v369
    %406 = vmatprep.subr.mxu0 0.0
    %407 = vmatpush2.xpose.msra.mxu0 0.0
    %408 = vmatprep.subr.mxu0 0.0
    %409 = vmatpush2.xpose.msra.mxu0 0.0
    %410 = vmatprep.subr.mxu0 0.0
    %411 = vmatpush2.xpose.msra.mxu0 0.0
    %412 = vmatprep.subr.mxu0 0.0
    %413 = vmatpush2.xpose.msra.mxu0 0.0
    %414 = vmatprep.subr.mxu0 0.0
    %415 = vmatpush2.xpose.msra.mxu0 0.0
    %416 = vmatprep.subr.mxu0 0.0
    %417 = vmatpush2.xpose.msra.mxu0 0.0
    %418 = vmatprep.subr.mxu0 0.0
    %419 = vmatpush2.xpose.msra.mxu0 0.0
    %420 = vmatprep.subr.mxu0 0.0
    %421 = vmatpush2.xpose.msra.mxu0 0.0
    %422 = vmatprep.subr.mxu0 0.0
    %423 = vmatpush2.xpose.msra.mxu0 0.0
    %424 = vmatprep.subr.mxu0 0.0
    %425 = vmatpush2.xpose.msra.mxu0 0.0
    %426 = vmatprep.subr.mxu0 0.0
    %427 = vmatpush2.xpose.msra.mxu0 0.0
    %428 = vmatprep.subr.mxu0 0.0
    %429 = vmatpush2.xpose.msra.mxu0 0.0
    %430 = vmatprep.subr.mxu0 0.0
    %431 = vmatpush2.xpose.msra.mxu0 0.0
    %432 = vmatprep.subr.mxu0 0.0
    %433 = vmatpush2.xpose.msra.mxu0 0.0
    %434 = vmatprep.subr.mxu0 0.0
    %435 = vmatpush2.xpose.msra.mxu0 0.0
    %436 = vmatprep.subr.mxu0 0.0
    %437 = vmatpush2.xpose.msra.mxu0 0.0
    %438 = vmatprep.mubr.f32.mxu0 0.0
    %439 = vmatmul.mubr.f32.gmra.mxu0 %v345
    %v440 = vpop.f32.mrf.mxu0
    %v441 = vadd.f32 %v328, %v440
    %v442 = vpop.f32.mrf.mxu0
    %443 = vmatprep.mubr.f32.mxu0 0.0
    %444 = vmatmul.mubr.f32.gmra.mxu0 %v348
    %v445 = vpop.f32.mrf.mxu0
    %v446 = vadd.f32 %v329, %v445
    %v447 = vpop.f32.mrf.mxu0
    %448 = vmatprep.mubr.f32.mxu0 0.0
    %449 = vmatmul.mubr.f32.gmra.mxu0 %v351
    %v450 = vpop.f32.mrf.mxu0
    %v451 = vadd.f32 %v330, %v450
    %v452 = vpop.f32.mrf.mxu0
    %453 = vmatprep.mubr.f32.mxu0 0.0
    %454 = vmatmul.mubr.f32.gmra.mxu0 %v354
    %v455 = vpop.f32.mrf.mxu0
    %v456 = vadd.f32 %v331, %v455
    %v457 = vpop.f32.mrf.mxu0
    %458 = vmatprep.mubr.f32.mxu0 0.0
    %459 = vmatmul.mubr.f32.gmra.mxu0 %v357
    %v460 = vpop.f32.mrf.mxu0
    %v461 = vadd.f32 %v332, %v460
    %v462 = vpop.f32.mrf.mxu0
    %463 = vmatprep.mubr.f32.mxu0 0.0
    %464 = vmatmul.mubr.f32.gmra.mxu0 %v360
    %v465 = vpop.f32.mrf.mxu0
    %v466 = vadd.f32 %v333, %v465
    %v467 = vpop.f32.mrf.mxu0
    %468 = vmatprep.mubr.f32.mxu0 0.0
    %469 = vmatmul.mubr.f32.gmra.mxu0 %v363
    %v470 = vpop.f32.mrf.mxu0
    %v471 = vadd.f32 %v334, %v470
    %v472 = vpop.f32.mrf.mxu0
    %473 = vmatprep.mubr.f32.mxu0 0.0
    %474 = vmatmul.mubr.f32.gmra.mxu0 %v366
    %v475 = vpop.f32.mrf.mxu0
    %v476 = vadd.f32 %v335, %v475
    %v477 = vpop.f32.mrf.mxu0
    %478 = vdwg.mxu0
    %vm479 = vcmask 130048
    %v480 = vsel %vm479, %v441, -inf
    %481 = vmax.xlane.f32.xlu0 %v480
    %v482 = vpop.xlane.xlu0 %481
    %v483 = vsel %vm479, %v446, -inf
    %484 = vmax.xlane.f32.xlu0 %v483
    %v485 = vpop.xlane.xlu0 %484
    %v486 = vsel %vm479, %v451, -inf
    %487 = vmax.xlane.f32.xlu0 %v486
    %v488 = vpop.xlane.xlu0 %487
    %v489 = vsel %vm479, %v456, -inf
    %490 = vmax.xlane.f32.xlu0 %v489
    %v491 = vpop.xlane.xlu0 %490
    %v492 = vsel %vm479, %v461, -inf
    %493 = vmax.xlane.f32.xlu0 %v492
    %v494 = vpop.xlane.xlu0 %493
    %v495 = vsel %vm479, %v466, -inf
    %496 = vmax.xlane.f32.xlu0 %v495
    %v497 = vpop.xlane.xlu0 %496
    %v498 = vsel %vm479, %v471, -inf
    %499 = vmax.xlane.f32.xlu0 %v498
    %v500 = vpop.xlane.xlu0 %499
    %v501 = vsel %vm479, %v476, -inf
    %502 = vmax.xlane.f32.xlu0 %v501
    %v503 = vpop.xlane.xlu0 %502
    %v504 = vsub.f32 %v441, %v482
    %v505 = vsub.f32 %v446, %v485
    %v506 = vsub.f32 %v451, %v488
    %v507 = vsub.f32 %v456, %v491
    %v508 = vsub.f32 %v461, %v494
    %v509 = vsub.f32 %v466, %v497
    %v510 = vsub.f32 %v471, %v500
    %v511 = vsub.f32 %v476, %v503
    %v512 = vmul.f32 %v504, 1.442695
    %v513 = vpow.pop %v512
    %v514 = vmul.f32 %v505, 1.442695
    %v515 = vpow.pop %v514
    %v516 = vmul.f32 %v506, 1.442695
    %v517 = vpow.pop %v516
    %v518 = vmul.f32 %v507, 1.442695
    %v519 = vpow.pop %v518
    %v520 = vmul.f32 %v508, 1.442695
    %v521 = vpow.pop %v520
    %v522 = vmul.f32 %v509, 1.442695
    %v523 = vpow.pop %v522
    %v524 = vmul.f32 %v510, 1.442695
    %v525 = vpow.pop %v524
    %v526 = vmul.f32 %v511, 1.442695
    %v527 = vpow.pop %v526
    %v528 = vsel %vm479, %v513, 0.0
    %529 = vadd.xlane.f32.xlu0 %v528
    %v530 = vpop.xlane.xlu0 %529
    %v531 = vsel %vm479, %v515, 0.0
    %532 = vadd.xlane.f32.xlu0 %v531
    %v533 = vpop.xlane.xlu0 %532
    %v534 = vsel %vm479, %v517, 0.0
    %535 = vadd.xlane.f32.xlu0 %v534
    %v536 = vpop.xlane.xlu0 %535
    %v537 = vsel %vm479, %v519, 0.0
    %538 = vadd.xlane.f32.xlu0 %v537
    %v539 = vpop.xlane.xlu0 %538
    %v540 = vsel %vm479, %v521, 0.0
    %541 = vadd.xlane.f32.xlu0 %v540
    %v542 = vpop.xlane.xlu0 %541
    %v543 = vsel %vm479, %v523, 0.0
    %544 = vadd.xlane.f32.xlu0 %v543
    %v545 = vpop.xlane.xlu0 %544
    %v546 = vsel %vm479, %v525, 0.0
    %547 = vadd.xlane.f32.xlu0 %v546
    %v548 = vpop.xlane.xlu0 %547
    %v549 = vsel %vm479, %v527, 0.0
    %550 = vadd.xlane.f32.xlu0 %v549
    %v551 = vpop.xlane.xlu0 %550
    %v552 = vrcp.pop %v530
    %v553 = vmul.f32 %v513, %v552
    %v554 = vrcp.pop %v533
    %v555 = vmul.f32 %v515, %v554
    %v556 = vrcp.pop %v536
    %v557 = vmul.f32 %v517, %v556
    %v558 = vrcp.pop %v539
    %v559 = vmul.f32 %v519, %v558
    %v560 = vrcp.pop %v542
    %v561 = vmul.f32 %v521, %v560
    %v562 = vrcp.pop %v545
    %v563 = vmul.f32 %v523, %v562
    %v564 = vrcp.pop %v548
    %v565 = vmul.f32 %v525, %v564
    %v566 = vrcp.pop %v551
    %v567 = vmul.f32 %v527, %v566
    %568 = vrot.lane.b32.xlu0 %v178, 64
    %v569 = vpop.permute.xlu0 %568
    %570 = vrot.lane.b32.xlu0 %v183, 64
    %v571 = vpop.permute.xlu0 %570
    %v575 = vsel %vm479, %v553, 0
    %v578 = vsel %vm479, %v555, 0
    %v581 = vsel %vm479, %v557, 0
    %v584 = vsel %vm479, %v559, 0
    %v587 = vsel %vm479, %v561, 0
    %v590 = vsel %vm479, %v563, 0
    %v593 = vsel %vm479, %v565, 0
    %v596 = vsel %vm479, %v567, 0
    %598 = vmatprep.subr.mxu0 0.0
    %599 = vmatpush1.msra.mxu0 0.0
    %600 = vmatprep.subr.mxu0 0.0
    %601 = vmatpush1.msra.mxu0 0.0
    %602 = vmatprep.subr.mxu0 0.0
    %603 = vmatpush1.msra.mxu0 0.0
    %604 = vmatprep.subr.mxu0 0.0
    %605 = vmatpush1.msra.mxu0 0.0
    %606 = vmatprep.subr.mxu0 0.0
    %607 = vmatpush1.msra.mxu0 0.0
    %608 = vmatprep.subr.mxu0 0.0
    %609 = vmatpush1.msra.mxu0 0.0
    %610 = vmatprep.subr.mxu0 0.0
    %611 = vmatpush1.msra.mxu0 0.0
    %612 = vmatprep.subr.mxu0 0.0
    %613 = vmatpush1.msra.mxu0 0.0
    %614 = vmatprep.subr.mxu0 0.0
    %615 = vmatpush1.msra.mxu0 0.0
    %616 = vmatprep.subr.mxu0 0.0
    %617 = vmatpush1.msra.mxu0 0.0
    %618 = vmatprep.subr.mxu0 0.0
    %619 = vmatpush1.msra.mxu0 0.0
    %620 = vmatprep.subr.mxu0 0.0
    %621 = vmatpush1.msra.mxu0 0.0
    %622 = vmatprep.subr.mxu0 0.0
    %623 = vmatpush1.msra.mxu0 0.0
    %624 = vmatprep.subr.mxu0 0.0
    %625 = vmatpush1.msra.mxu0 0.0
    %626 = vmatprep.subr.mxu0 0.0
    %627 = vmatpush1.msra.mxu0 %v571
    %628 = vmatprep.subr.mxu0 0.0
    %629 = vmatpush1.msra.mxu0 %v569
    %630 = vmatprep.subr.mxu0 0.0
    %631 = vmatpush2.msra.mxu0 0.0
    %632 = vmatprep.subr.mxu0 0.0
    %633 = vmatpush2.msra.mxu0 0.0
    %634 = vmatprep.subr.mxu0 0.0
    %635 = vmatpush2.msra.mxu0 0.0
    %636 = vmatprep.subr.mxu0 0.0
    %637 = vmatpush2.msra.mxu0 0.0
    %638 = vmatprep.subr.mxu0 0.0
    %639 = vmatpush2.msra.mxu0 0.0
    %640 = vmatprep.subr.mxu0 0.0
    %641 = vmatpush2.msra.mxu0 0.0
    %642 = vmatprep.subr.mxu0 0.0
    %643 = vmatpush2.msra.mxu0 0.0
    %644 = vmatprep.subr.mxu0 0.0
    %645 = vmatpush2.msra.mxu0 0.0
    %646 = vmatprep.subr.mxu0 0.0
    %647 = vmatpush2.msra.mxu0 0.0
    %648 = vmatprep.subr.mxu0 0.0
    %649 = vmatpush2.msra.mxu0 0.0
    %650 = vmatprep.subr.mxu0 0.0
    %651 = vmatpush2.msra.mxu0 0.0
    %652 = vmatprep.subr.mxu0 0.0
    %653 = vmatpush2.msra.mxu0 0.0
    %654 = vmatprep.subr.mxu0 0.0
    %655 = vmatpush2.msra.mxu0 0.0
    %656 = vmatprep.subr.mxu0 0.0
    %657 = vmatpush2.msra.mxu0 0.0
    %658 = vmatprep.subr.mxu0 0.0
    %659 = vmatpush2.msra.mxu0 0.0
    %660 = vmatprep.subr.mxu0 0.0
    %661 = vmatpush2.msra.mxu0 0.0
    %662 = vmatprep.mubr.f32.mxu0 0.0
    %663 = vmatmul.mubr.f32.gmra.mxu0 %v575
    %v664 = vpop.f32.mrf.mxu0
    %v665 = vadd.f32 0.0, %v664
    %v666 = vpop.f32.mrf.mxu0
    %667 = vmatprep.mubr.f32.mxu0 0.0
    %668 = vmatmul.mubr.f32.gmra.mxu0 %v578
    %v669 = vpop.f32.mrf.mxu0
    %v670 = vadd.f32 0.0, %v669
    %v671 = vpop.f32.mrf.mxu0
    %672 = vmatprep.mubr.f32.mxu0 0.0
    %673 = vmatmul.mubr.f32.gmra.mxu0 %v581
    %v674 = vpop.f32.mrf.mxu0
    %v675 = vadd.f32 0.0, %v674
    %v676 = vpop.f32.mrf.mxu0
    %677 = vmatprep.mubr.f32.mxu0 0.0
    %678 = vmatmul.mubr.f32.gmra.mxu0 %v584
    %v679 = vpop.f32.mrf.mxu0
    %v680 = vadd.f32 0.0, %v679
    %v681 = vpop.f32.mrf.mxu0
    %682 = vmatprep.mubr.f32.mxu0 0.0
    %683 = vmatmul.mubr.f32.gmra.mxu0 %v587
    %v684 = vpop.f32.mrf.mxu0
    %v685 = vadd.f32 0.0, %v684
    %v686 = vpop.f32.mrf.mxu0
    %687 = vmatprep.mubr.f32.mxu0 0.0
    %688 = vmatmul.mubr.f32.gmra.mxu0 %v590
    %v689 = vpop.f32.mrf.mxu0
    %v690 = vadd.f32 0.0, %v689
    %v691 = vpop.f32.mrf.mxu0
    %692 = vmatprep.mubr.f32.mxu0 0.0
    %693 = vmatmul.mubr.f32.gmra.mxu0 %v593
    %v694 = vpop.f32.mrf.mxu0
    %v695 = vadd.f32 0.0, %v694
    %v696 = vpop.f32.mrf.mxu0
    %697 = vmatprep.mubr.f32.mxu0 0.0
    %698 = vmatmul.mubr.f32.gmra.mxu0 %v596
    %v699 = vpop.f32.mrf.mxu0
    %v700 = vadd.f32 0.0, %v699
    %v701 = vpop.f32.mrf.mxu0
    %702 = vdwg.mxu0
    %v703 = vmul.f32 %v665, %v320
    %v704 = vmul.f32 %v670, %v321
    %v705 = vmul.f32 %v675, %v322
    %v706 = vmul.f32 %v680, %v323
    %v707 = vmul.f32 %v685, %v324
    %v708 = vmul.f32 %v690, %v325
    %v709 = vmul.f32 %v695, %v326
    %v710 = vmul.f32 %v700, %v327
    %v711 = vadd.f32 %v703, %v705
    %v712 = vadd.f32 %v704, %v706
    %v713 = vadd.f32 %v711, %v707
    %v714 = vadd.f32 %v712, %v708
    %v715 = vadd.f32 %v713, %v709
    %v716 = vadd.f32 %v714, %v710
    %v717 = vmul.f32 %v187, %v187
    %v718 = vmul.f32 %v192, %v192
    %v719 = vmul.f32 %v187, %v717
    %v720 = vmul.f32 %v192, %v718
    %v721 = vmul.f32 %v719, 0.044715
    %v722 = vmul.f32 %v720, 0.044715
    %v723 = vadd.f32 %v187, %v721
    %v724 = vadd.f32 %v192, %v722
    %v725 = vmul.f32 %v723, 0.7978846
    %v726 = vmul.f32 %v724, 0.7978846
    %v727 = vtanh.pop %v725
    %v728 = vtanh.pop %v726
    %v729 = vadd.f32 %v727, 1.0
    %v730 = vadd.f32 %v728, 1.0
    %v731 = vmul.f32 %v729, 0.5
    %v732 = vmul.f32 %v730, 0.5
    %v733 = vmul.f32 %v187, %v731
    %v734 = vmul.f32 %v192, %v732
    %v735 = vsel %vm24, %v715, 1.0
    %v736 = vsel %vm24, %v716, 1.0
    %v737 = vld [vmem:[%s3] sm:$0xff]
    %v738 = vld [vmem:[%s3 + $0x8] sm:$0xff]
    %v739 = vld [vmem:[%s3 + $0x10] sm:$0xff]
    %v740 = vld [vmem:[%s3 + $0x18] sm:$0xff]
    %v741 = vld [vmem:[%s3 + $0x20] sm:$0xff]
    %v742 = vld [vmem:[%s3 + $0x28] sm:$0xff]
    %v743 = vld [vmem:[%s3 + $0x30] sm:$0xff]
    %v744 = vld [vmem:[%s3 + $0x38] sm:$0xff]
    %v745 = vld [vmem:[%s3 + $0x40] sm:$0xff]
    %v746 = vld [vmem:[%s3 + $0x48] sm:$0xff]
    %v747 = vld [vmem:[%s3 + $0x50] sm:$0xff]
    %v748 = vld [vmem:[%s3 + $0x58] sm:$0xff]
    %v749 = vld [vmem:[%s3 + $0x60] sm:$0xff]
    %v750 = vld [vmem:[%s3 + $0x68] sm:$0xff]
    %v751 = vld [vmem:[%s3 + $0x70] sm:$0xff]
    %v752 = vld [vmem:[%s3 + $0x78] sm:$0xff]
    %v753 = vld [vmem:[%s3 + $0x80] sm:$0xff]
    %v754 = vld [vmem:[%s3 + $0x88] sm:$0xff]
    %v755 = vld [vmem:[%s3 + $0x90] sm:$0xff]
    %v756 = vld [vmem:[%s3 + $0x98] sm:$0xff]
    %v757 = vld [vmem:[%s3 + $0xa0] sm:$0x1]
    %v759 = vsel %vm90, %v735, 0
    %v762 = vsel %vm90, %v736, 0
    %v765 = vsel %vm103, %v757, 0
    %767 = vmatprep.subr.mxu0 0.0
    %768 = vmatpush1.msra.mxu0 %v752
    %769 = vmatprep.subr.mxu0 0.0
    %770 = vmatpush1.msra.mxu0 %v751
    %771 = vmatprep.subr.mxu0 0.0
    %772 = vmatpush1.msra.mxu0 %v750
    %773 = vmatprep.subr.mxu0 0.0
    %774 = vmatpush1.msra.mxu0 %v749
    %775 = vmatprep.subr.mxu0 0.0
    %776 = vmatpush1.msra.mxu0 %v748
    %777 = vmatprep.subr.mxu0 0.0
    %778 = vmatpush1.msra.mxu0 %v747
    %779 = vmatprep.subr.mxu0 0.0
    %780 = vmatpush1.msra.mxu0 %v746
    %781 = vmatprep.subr.mxu0 0.0
    %782 = vmatpush1.msra.mxu0 %v745
    %783 = vmatprep.subr.mxu0 0.0
    %784 = vmatpush1.msra.mxu0 %v744
    %785 = vmatprep.subr.mxu0 0.0
    %786 = vmatpush1.msra.mxu0 %v743
    %787 = vmatprep.subr.mxu0 0.0
    %788 = vmatpush1.msra.mxu0 %v742
    %789 = vmatprep.subr.mxu0 0.0
    %790 = vmatpush1.msra.mxu0 %v741
    %791 = vmatprep.subr.mxu0 0.0
    %792 = vmatpush1.msra.mxu0 %v740
    %793 = vmatprep.subr.mxu0 0.0
    %794 = vmatpush1.msra.mxu0 %v739
    %795 = vmatprep.subr.mxu0 0.0
    %796 = vmatpush1.msra.mxu0 %v738
    %797 = vmatprep.subr.mxu0 0.0
    %798 = vmatpush1.msra.mxu0 %v737
    %799 = vmatprep.subr.mxu0 0.0
    %800 = vmatpush2.msra.mxu0 0.0
    %801 = vmatprep.subr.mxu0 0.0
    %802 = vmatpush2.msra.mxu0 0.0
    %803 = vmatprep.subr.mxu0 0.0
    %804 = vmatpush2.msra.mxu0 0.0
    %805 = vmatprep.subr.mxu0 0.0
    %806 = vmatpush2.msra.mxu0 0.0
    %807 = vmatprep.subr.mxu0 0.0
    %808 = vmatpush2.msra.mxu0 0.0
    %809 = vmatprep.subr.mxu0 0.0
    %810 = vmatpush2.msra.mxu0 0.0
    %811 = vmatprep.subr.mxu0 0.0
    %812 = vmatpush2.msra.mxu0 0.0
    %813 = vmatprep.subr.mxu0 0.0
    %814 = vmatpush2.msra.mxu0 0.0
    %815 = vmatprep.subr.mxu0 0.0
    %816 = vmatpush2.msra.mxu0 0.0
    %817 = vmatprep.subr.mxu0 0.0
    %818 = vmatpush2.msra.mxu0 0.0
    %819 = vmatprep.subr.mxu0 0.0
    %820 = vmatpush2.msra.mxu0 0.0
    %821 = vmatprep.subr.mxu0 0.0
    %822 = vmatpush2.msra.mxu0 %v765
    %823 = vmatprep.subr.mxu0 0.0
    %824 = vmatpush2.msra.mxu0 %v756
    %825 = vmatprep.subr.mxu0 0.0
    %826 = vmatpush2.msra.mxu0 %v755
    %827 = vmatprep.subr.mxu0 0.0
    %828 = vmatpush2.msra.mxu0 %v754
    %829 = vmatprep.subr.mxu0 0.0
    %830 = vmatpush2.msra.mxu0 %v753
    %831 = vmatprep.mubr.f32.mxu0 %v759
    %832 = vmatmul.mubr.f32.gmra.mxu0 %v733
    %v833 = vpop.f32.mrf.mxu0
    %v834 = vadd.f32 %v18, %v833
    %v835 = vpop.f32.mrf.mxu0
    %836 = vmatprep.mubr.f32.mxu0 %v762
    %837 = vmatmul.mubr.f32.gmra.mxu0 %v734
    %v838 = vpop.f32.mrf.mxu0
    %v839 = vadd.f32 %v19, %v838
    %v840 = vpop.f32.mrf.mxu0
    %841 = vdwg.mxu0
    %842 = vst.msk [vmem:[#allocation2] sm:$0xff] %vm24, %v834
    %843 = vst.msk [vmem:[#allocation2 + $0x8] sm:$0xff] %vm24, %v839
    // Predicated region
    $region18: #{block_forward.1} parent=1 // pred_check
      _
    $region19: #{block_forward.1} parent=1 // pred_check_branch
      %845 = sbr.rel (0) target = $region21
    $region20: #{block_forward.1} parent=1 // pred_region
      %s847 = ssub.s32 256, 256
      %848 = vsyncadd [#allocation3], %s847
      %s849 = sshll.u32 [#allocation2], 4
      %s850 = int_to_ptr.vmem [resolvable:$true] %s849
      %855 = dma.vmem_to_hbm [thread:$0]  %s850, 256, %s4, [#allocation3], 128, 128, 8
    $region21: #{block_forward.1} parent=1 // pred_fallthru
      _
    // Predicated region
    $region22: #{block_forward.1} parent=1 // pred_check
      _
    $region23: #{block_forward.1} parent=1 // pred_check_branch
      %857 = sbr.rel (0) target = $region25
    $region24: #{block_forward.1} parent=1 // pred_region
      %858 = dma.done [#allocation3], 256
    $region25: #{block_forward.1} parent=1 // pred_fallthru
      _
    %859 = vsyncpa [#allocation3], 1

</llo_original>
